<compile_context>
chip_gen: v7x
topology: tpu7x:2x2x1
jax: 0.10.0
libtpu: 0.0.40
codegen_flags: <defaults>
</compile_context>

<pallas_src>
import functools

import jax
import jax.numpy as jnp
import numpy as np
from jax.experimental import pallas as pl
from jax.experimental.pallas import tpu as pltpu


def _round_up(x, m):
    return ((x + m - 1) // m) * m


# ----------------------------------------------------------------------------
# Kernels
# ----------------------------------------------------------------------------
def mlp_bn_kernel(x_ref,       # VMEM (tN, D)  bf16 : input row tile
                  w1_ref,      # VMEM (D, Hh)  bf16 : mlp_layer1.weight^T (resident)
                  gamma_ref,   # VMEM (1, Hh)  f32  : BatchNorm1d gamma (resident)
                  beta_ref,    # VMEM (1, Hh)  f32  : BatchNorm1d beta  (resident)
                  w2_ref,      # VMEM (Hh, O)  bf16 : mlp_layer2.weight^T (resident)
                  out_ref,     # VMEM (tN, O)  f32  : output tile
                  sum_ref,     # VMEM (1, Hh)  f32  : scratch  sum_z
                  sumsq_ref,   # VMEM (1, Hh)  f32  : scratch  sum_z2
                  *, inv_n):
    phase = pl.program_id(0)
    tile = pl.program_id(1)

    # layer1 on the MXU: bf16 x bf16 -> f32 accumulate.  Recomputed in phase 1 so the
    # full z never has to stay resident (memory stays O(tile), not O(N)).
    z = jnp.dot(x_ref[...], w1_ref[...], preferred_element_type=jnp.float32)  # [tN, Hh] f32

    @pl.when((phase == 0) & (tile == 0))
    def _init():
        sum_ref[...] = jnp.zeros_like(sum_ref)
        sumsq_ref[...] = jnp.zeros_like(sumsq_ref)

    @pl.when(phase == 0)
    def _accumulate_stats():
        # Zero-padded rows contribute exactly 0 to both accumulators.
        sum_ref[...] += jnp.sum(z, axis=0, keepdims=True)
        sumsq_ref[...] += jnp.sum(z * z, axis=0, keepdims=True)

    @pl.when(phase == 1)
    def _normalize_and_project():
        mean = sum_ref[...] * inv_n                              # [1, Hh]
        var = sumsq_ref[...] * inv_n - mean * mean               # biased (training) variance
        scale = gamma_ref[...] * jax.lax.rsqrt(var + 1e-5)       # fold gamma into rsqrt
        shift = beta_ref[...] - mean * scale
        h = jnp.maximum(z * scale + shift, 0.0).astype(jnp.bfloat16)
        out_ref[...] = jnp.dot(h, w2_ref[...], preferred_element_type=jnp.float32)


def mlp_nobn_kernel(x_ref, w1_ref, w2_ref, out_ref):
    # batch == 1 path of the module: no BatchNorm.
    z = jnp.dot(x_ref[...], w1_ref[...], preferred_element_type=jnp.float32)
    h = jnp.maximum(z, 0.0).astype(jnp.bfloat16)
    out_ref[...] = jnp.dot(h, w2_ref[...], preferred_element_type=jnp.float32)


# ----------------------------------------------------------------------------
# Wrapper
# ----------------------------------------------------------------------------
def mlp_forward(x, params, *, row_tile=128):
    """Forward pass of the PyTorch MLP module as Pallas TPU kernels."""
    N, D = x.shape
    Hh, D_in = params["w1"].shape          # [hidden_dim, input_dim]
    O = params["w2"].shape[0]              # [output_dim, hidden_dim]
    assert D == D_in

    # bf16 MXU operands (f32 accumulation happens inside the kernels).
    x_bf = x.astype(jnp.bfloat16)
    w1_t = params["w1"].T.astype(jnp.bfloat16)        # [D, Hh]
    w2_t = params["w2"].T.astype(jnp.bfloat16)        # [Hh, O]
    gamma = params["gamma"].reshape(1, Hh).astype(jnp.float32)
    beta = params["beta"].reshape(1, Hh).astype(jnp.float32)

    compiler_params = pltpu.CompilerParams(
        # Phase 1 depends on BN stats from every phase-0 tile -> no parallel axes.
        dimension_semantics=("arbitrary", "arbitrary"),
        # Sized for v7x (64 MiB physical / 32 MiB default scoped); tiles here are tiny.
        vmem_limit_bytes=32 * 1024 * 1024,
    )

    if N == 1:
        # Module skips BatchNorm for a single-row batch.
        vmem = pl.BlockSpec(memory_space=pltpu.MemorySpace.VMEM)
        return pl.pallas_call(
            mlp_nobn_kernel,
            out_shape=jax.ShapeDtypeStruct((1, O), jnp.float32),
            in_specs=[vmem, vmem, vmem],
            out_specs=vmem,
            compiler_params=pltpu.CompilerParams(vmem_limit_bytes=32 * 1024 * 1024),
        )(x_bf, w1_t, w2_t)

    # Row tiling: multiple of 16 (bf16 sublane packing), zero-pad rows.
    tN = min(row_tile, _round_up(N, 16))
    tN = _round_up(tN, 16)
    padded_n = _round_up(N, tN)
    if padded_n != N:
        x_bf = jnp.pad(x_bf, ((0, padded_n - N), (0, 0)))
    num_tiles = padded_n // tN

    grid_spec = pltpu.PrefetchScalarGridSpec(
        num_scalar_prefetch=0,
        grid=(2, num_tiles),                                        # (phase, row tile)
        in_specs=[
            pl.BlockSpec((tN, D), lambda p, t: (t, 0)),             # x tile (pipelined)
            pl.BlockSpec((D, Hh), lambda p, t: (0, 0)),             # W1^T (resident)
            pl.BlockSpec((1, Hh), lambda p, t: (0, 0)),             # gamma (resident)
            pl.BlockSpec((1, Hh), lambda p, t: (0, 0)),             # beta  (resident)
            pl.BlockSpec((Hh, O), lambda p, t: (0, 0)),             # W2^T (resident)
        ],
        out_specs=pl.BlockSpec((tN, O), lambda p, t: (t, 0)),
        scratch_shapes=[
            pltpu.VMEM((1, Hh), jnp.float32),                       # sum_z
            pltpu.VMEM((1, Hh), jnp.float32),                       # sum_z^2
        ],
    )

    out_padded = pl.pallas_call(
        functools.partial(mlp_bn_kernel, inv_n=1.0 / N),
        out_shape=jax.ShapeDtypeStruct((padded_n, O), jnp.float32),
        grid_spec=grid_spec,
        compiler_params=compiler_params,
    )(x_bf, w1_t, gamma, beta, w2_t)

    return out_padded[:N]


# ----------------------------------------------------------------------------
# Pure-JAX reference (same bf16 operand precision as the kernel's MXU path)
# ----------------------------------------------------------------------------
def reference_forward(x, params):
    w1_t = params["w1"].T.astype(jnp.bfloat16)
    w2_t = params["w2"].T.astype(jnp.bfloat16)
    z = jnp.dot(x.astype(jnp.bfloat16), w1_t, preferred_element_type=jnp.float32)
    if x.shape[0] == 1:
        h = jax.nn.relu(z)
    else:
        mean = z.mean(0, keepdims=True)
        var = ((z - mean) ** 2).mean(0, keepdims=True)           # biased (training) variance
        zn = (z - mean) * jax.lax.rsqrt(var + 1e-5)
        h = jax.nn.relu(params["gamma"] * zn + params["beta"])
    return jnp.dot(h.astype(jnp.bfloat16), w2_t, preferred_element_type=jnp.float32)


def xavier_uniform(key, out_f, in_f):
    bound = float(np.sqrt(6.0 / (in_f + out_f)))
    return jax.random.uniform(key, (out_f, in_f), jnp.float32, -bound, bound)


if __name__ == "__main__":
    # Shapes consistent with the module's use as a GIN aggregator:
    #   input_dim = hidden_dim = 32, output_dim = 16, batch = number of node rows.
    D, Hh, O = 32, 32, 16
    N = 200  # > row_tile after padding -> exercises multi-tile, two-phase BN path

    key = jax.random.PRNGKey(0)
    k_w1, k_w2, k_x, k_x1 = jax.random.split(key, 4)

    params = {
        "w1": xavier_uniform(k_w1, Hh, D),        # mlp_layer1.weight [Hh, D], no bias
        "w2": xavier_uniform(k_w2, O, Hh),        # mlp_layer2.weight [O, Hh], no bias
        "gamma": jnp.ones((Hh,), jnp.float32),    # BatchNorm1d affine defaults
        "beta": jnp.zeros((Hh,), jnp.float32),
    }

    # Multi-row batch (BatchNorm branch).
    x = jax.random.normal(k_x, (N, D), jnp.float32)
    out = jax.block_until_ready(mlp_forward(x, params))
    ref = reference_forward(x, params)
    np.testing.assert_allclose(np.asarray(out), np.asarray(ref), rtol=1e-2, atol=1e-2)

    # Single-row batch (module skips BatchNorm).
    x1 = jax.random.normal(k_x1, (1, D), jnp.float32)
    out1 = jax.block_until_ready(mlp_forward(x1, params))
    ref1 = reference_forward(x1, params)
    np.testing.assert_allclose(np.asarray(out1), np.asarray(ref1), rtol=1e-2, atol=1e-2)

    print("KERNEL_OK")
</pallas_src>

<mosaic_0001>
module attributes {stable_mosaic.version = 11 : i64} {
  func.func @mlp_bn_kernel(%arg0: i32, %arg1: i32, %arg2: memref<128x32xbf16, #tpu.memory_space<vmem>>, %arg3: memref<32x32xbf16, #tpu.memory_space<vmem>>, %arg4: memref<1x32xf32, #tpu.memory_space<vmem>>, %arg5: memref<1x32xf32, #tpu.memory_space<vmem>>, %arg6: memref<32x16xbf16, #tpu.memory_space<vmem>>, %arg7: memref<128x16xf32, #tpu.memory_space<vmem>>, %arg8: memref<1x32xf32, #tpu.memory_space<vmem>>, %arg9: memref<1x32xf32, #tpu.memory_space<vmem>>) attributes {dimension_semantics = [#tpu.dimension_semantics<arbitrary>, #tpu.dimension_semantics<arbitrary>], iteration_bounds = array<i64: 2, 2>, scalar_prefetch = 0 : i64, scratch_operands = 2 : i64, tpu.core_type = #tpu.core_type<tc>, window_params = [{transform_indices = @transform_0, window_bounds = array<i64: 128, 32>}, {pipeline_mode = #tpu.pipeline_mode<synchronous>, transform_indices = @transform_1, window_bounds = array<i64: 32, 32>}, {pipeline_mode = #tpu.pipeline_mode<synchronous>, transform_indices = @transform_2, window_bounds = array<i64: 1, 32>}, {pipeline_mode = #tpu.pipeline_mode<synchronous>, transform_indices = @transform_3, window_bounds = array<i64: 1, 32>}, {pipeline_mode = #tpu.pipeline_mode<synchronous>, transform_indices = @transform_4, window_bounds = array<i64: 32, 16>}, {transform_indices = @transform_5, window_bounds = array<i64: 128, 16>}]} {
    %c0 = arith.constant 0 : index
    %c0_0 = arith.constant 0 : index
    %0 = vector.load %arg2[%c0, %c0_0] : memref<128x32xbf16, #tpu.memory_space<vmem>>, vector<128x32xbf16>
    %c0_1 = arith.constant 0 : index
    %c0_2 = arith.constant 0 : index
    %1 = vector.load %arg3[%c0_1, %c0_2] : memref<32x32xbf16, #tpu.memory_space<vmem>>, vector<32x32xbf16>
    %cst = arith.constant dense<0.000000e+00> : vector<128x32xf32>
    %2 = tpu.matmul %0, %1, %cst {dimension_numbers = #tpu.dot_dimension_numbers<[1], [0], [0], [1], [0, 0, 1, 1], [], []>} : vector<128x32xbf16>, vector<32x32xbf16>, vector<128x32xf32> -> vector<128x32xf32>
    %c0_i32 = arith.constant 0 : i32
    %3 = arith.cmpi eq, %arg0, %c0_i32 : i32
    %c0_i32_3 = arith.constant 0 : i32
    %4 = arith.cmpi eq, %arg1, %c0_i32_3 : i32
    %5 = arith.andi %3, %4 : i1
    %6 = arith.extui %5 : i1 to i32
    %c0_i32_4 = arith.constant 0 : i32
    %7 = arith.cmpi ne, %6, %c0_i32_4 : i32
    scf.if %7 {
      %cst_8 = arith.constant 0.000000e+00 : f32
      %14 = vector.broadcast %cst_8 : f32 to vector<1x32xf32>
      %c0_9 = arith.constant 0 : index
      %c0_10 = arith.constant 0 : index
      %15 = vector.load %arg8[%c0_9, %c0_10] : memref<1x32xf32, #tpu.memory_space<vmem>>, vector<1x32xf32>
      tpu.vector_store %arg8[%c0_9, %c0_10], %14 {strides = array<i32>} : memref<1x32xf32, #tpu.memory_space<vmem>>, vector<1x32xf32>,
      %cst_11 = arith.constant 0.000000e+00 : f32
      %16 = vector.broadcast %cst_11 : f32 to vector<1x32xf32>
      %c0_12 = arith.constant 0 : index
      %c0_13 = arith.constant 0 : index
      %17 = vector.load %arg9[%c0_12, %c0_13] : memref<1x32xf32, #tpu.memory_space<vmem>>, vector<1x32xf32>
      tpu.vector_store %arg9[%c0_12, %c0_13], %16 {strides = array<i32>} : memref<1x32xf32, #tpu.memory_space<vmem>>, vector<1x32xf32>,
    } else {
    }
    %c0_i32_5 = arith.constant 0 : i32
    %8 = arith.cmpi eq, %arg0, %c0_i32_5 : i32
    %9 = arith.extui %8 : i1 to i32
    %c0_i32_6 = arith.constant 0 : i32
    %10 = arith.cmpi ne, %9, %c0_i32_6 : i32
    scf.if %10 {
      %c0_8 = arith.constant 0 : index
      %c0_9 = arith.constant 0 : index
      %14 = vector.load %arg8[%c0_8, %c0_9] : memref<1x32xf32, #tpu.memory_space<vmem>>, vector<1x32xf32>
      %cst_10 = arith.constant dense<0.000000e+00> : vector<32xf32>
      %15 = vector.multi_reduction <add>, %2, %cst_10 [0] : vector<128x32xf32> to vector<32xf32>
      %16 = vector.shape_cast %15 : vector<32xf32> to vector<1x32xf32>
      %17 = arith.addf %14, %16 : vector<1x32xf32>
      %c0_11 = arith.constant 0 : index
      %c0_12 = arith.constant 0 : index
      %18 = vector.load %arg8[%c0_11, %c0_12] : memref<1x32xf32, #tpu.memory_space<vmem>>, vector<1x32xf32>
      tpu.vector_store %arg8[%c0_11, %c0_12], %17 {strides = array<i32>} : memref<1x32xf32, #tpu.memory_space<vmem>>, vector<1x32xf32>,
      %c0_13 = arith.constant 0 : index
      %c0_14 = arith.constant 0 : index
      %19 = vector.load %arg9[%c0_13, %c0_14] : memref<1x32xf32, #tpu.memory_space<vmem>>, vector<1x32xf32>
      %20 = arith.mulf %2, %2 : vector<128x32xf32>
      %cst_15 = arith.constant dense<0.000000e+00> : vector<32xf32>
      %21 = vector.multi_reduction <add>, %20, %cst_15 [0] : vector<128x32xf32> to vector<32xf32>
      %22 = vector.shape_cast %21 : vector<32xf32> to vector<1x32xf32>
      %23 = arith.addf %19, %22 : vector<1x32xf32>
      %c0_16 = arith.constant 0 : index
      %c0_17 = arith.constant 0 : index
      %24 = vector.load %arg9[%c0_16, %c0_17] : memref<1x32xf32, #tpu.memory_space<vmem>>, vector<1x32xf32>
      tpu.vector_store %arg9[%c0_16, %c0_17], %23 {strides = array<i32>} : memref<1x32xf32, #tpu.memory_space<vmem>>, vector<1x32xf32>,
    } else {
    }
    %c1_i32 = arith.constant 1 : i32
    %11 = arith.cmpi eq, %arg0, %c1_i32 : i32
    %12 = arith.extui %11 : i1 to i32
    %c0_i32_7 = arith.constant 0 : i32
    %13 = arith.cmpi ne, %12, %c0_i32_7 : i32
    scf.if %13 {
      %c0_8 = arith.constant 0 : index
      %c0_9 = arith.constant 0 : index
      %14 = vector.load %arg8[%c0_8, %c0_9] : memref<1x32xf32, #tpu.memory_space<vmem>>, vector<1x32xf32>
      %cst_10 = arith.constant 5.000000e-03 : f32
      %15 = vector.broadcast %cst_10 : f32 to vector<1x32xf32>
      %16 = arith.mulf %14, %15 : vector<1x32xf32>
      %c0_11 = arith.constant 0 : index
      %c0_12 = arith.constant 0 : index
      %17 = vector.load %arg9[%c0_11, %c0_12] : memref<1x32xf32, #tpu.memory_space<vmem>>, vector<1x32xf32>
      %cst_13 = arith.constant 5.000000e-03 : f32
      %18 = vector.broadcast %cst_13 : f32 to vector<1x32xf32>
      %19 = arith.mulf %17, %18 : vector<1x32xf32>
      %20 = arith.mulf %16, %16 : vector<1x32xf32>
      %21 = arith.subf %19, %20 : vector<1x32xf32>
      %c0_14 = arith.constant 0 : index
      %c0_15 = arith.constant 0 : index
      %22 = vector.load %arg4[%c0_14, %c0_15] : memref<1x32xf32, #tpu.memory_space<vmem>>, vector<1x32xf32>
      %cst_16 = arith.constant 9.99999974E-6 : f32
      %23 = vector.broadcast %cst_16 : f32 to vector<1x32xf32>
      %24 = arith.addf %21, %23 : vector<1x32xf32>
      %25 = math.rsqrt %24 : vector<1x32xf32>
      %26 = arith.mulf %22, %25 : vector<1x32xf32>
      %c0_17 = arith.constant 0 : index
      %c0_18 = arith.constant 0 : index
      %27 = vector.load %arg5[%c0_17, %c0_18] : memref<1x32xf32, #tpu.memory_space<vmem>>, vector<1x32xf32>
      %28 = arith.mulf %16, %26 : vector<1x32xf32>
      %29 = arith.subf %27, %28 : vector<1x32xf32>
      %30 = vector.broadcast %26 : vector<1x32xf32> to vector<128x32xf32>
      %31 = arith.mulf %2, %30 : vector<128x32xf32>
      %32 = vector.broadcast %29 : vector<1x32xf32> to vector<128x32xf32>
      %33 = arith.addf %31, %32 : vector<128x32xf32>
      %cst_19 = arith.constant 0.000000e+00 : f32
      %34 = vector.broadcast %cst_19 : f32 to vector<128x32xf32>
      %35 = arith.maximumf %33, %34 : vector<128x32xf32>
      %36 = arith.truncf %35 : vector<128x32xf32> to vector<128x32xbf16>
      %c0_20 = arith.constant 0 : index
      %c0_21 = arith.constant 0 : index
      %37 = vector.load %arg6[%c0_20, %c0_21] : memref<32x16xbf16, #tpu.memory_space<vmem>>, vector<32x16xbf16>
      %cst_22 = arith.constant dense<0.000000e+00> : vector<128x16xf32>
      %38 = tpu.matmul %36, %37, %cst_22 {dimension_numbers = #tpu.dot_dimension_numbers<[1], [0], [0], [1], [0, 0, 1, 1], [], []>} : vector<128x32xbf16>, vector<32x16xbf16>, vector<128x16xf32> -> vector<128x16xf32>
      %c0_23 = arith.constant 0 : index
      %c0_24 = arith.constant 0 : index
      %39 = vector.load %arg7[%c0_23, %c0_24] : memref<128x16xf32, #tpu.memory_space<vmem>>, vector<128x16xf32>
      tpu.vector_store %arg7[%c0_23, %c0_24], %38 {strides = array<i32>} : memref<128x16xf32, #tpu.memory_space<vmem>>, vector<128x16xf32>,
    } else {
    }
    return
  }
  func.func @transform_0(%arg0: i32, %arg1: i32) -> (i32, i32) {
    %c0_i32 = arith.constant 0 : i32
    %c0_i32_0 = arith.constant 0 : i32
    return %arg1, %c0_i32 : i32, i32
  }
  func.func @transform_1(%arg0: i32, %arg1: i32) -> (i32, i32) {
    %c0_i32 = arith.constant 0 : i32
    %c0_i32_0 = arith.constant 0 : i32
    %c0_i32_1 = arith.constant 0 : i32
    return %c0_i32, %c0_i32_0 : i32, i32
  }
  func.func @transform_2(%arg0: i32, %arg1: i32) -> (i32, i32) {
    %c0_i32 = arith.constant 0 : i32
    %c0_i32_0 = arith.constant 0 : i32
    %c0_i32_1 = arith.constant 0 : i32
    return %c0_i32, %c0_i32_0 : i32, i32
  }
  func.func @transform_3(%arg0: i32, %arg1: i32) -> (i32, i32) {
    %c0_i32 = arith.constant 0 : i32
    %c0_i32_0 = arith.constant 0 : i32
    %c0_i32_1 = arith.constant 0 : i32
    return %c0_i32, %c0_i32_0 : i32, i32
  }
  func.func @transform_4(%arg0: i32, %arg1: i32) -> (i32, i32) {
    %c0_i32 = arith.constant 0 : i32
    %c0_i32_0 = arith.constant 0 : i32
    %c0_i32_1 = arith.constant 0 : i32
    return %c0_i32, %c0_i32_0 : i32, i32
  }
  func.func @transform_5(%arg0: i32, %arg1: i32) -> (i32, i32) {
    %c0_i32 = arith.constant 0 : i32
    %c0_i32_0 = arith.constant 0 : i32
    return %arg1, %c0_i32 : i32, i32
  }
}

</mosaic_0001>

<llo_original>
// kernel: tpu_custom_call.1
$region0: #{tpu_custom_call.1}
  #allocation0 [shape = 'u32[]', space=smem, size = 0x4, offset = 0x4, fixed_abs, tag = 'smem constant byte address 0x4 - core index']
  #allocation1 [shape = 'u32[144,128]{1,0:T(1,128)}', space=vmem, size = 0x12000, scoped, tag = 'internal scratch']
  #allocation2 [shape = 'f32[1,32]{1,0:T(1,128)}', space=vmem, size = 0x200, scoped, tag = 'scratch operand']
  #allocation3 [shape = 'f32[1,32]{1,0:T(1,128)}', space=vmem, size = 0x200, scoped, tag = 'scratch operand']
  %s0 = inlined_call_operand.vmem [shape: bf16[256,32], index: 0, kind: input, shape index: {}]
  %s1 = inlined_call_operand.vmem [shape: bf16[32,32], index: 1, kind: input, shape index: {}]
  %s2 = inlined_call_operand.vmem [shape: f32[1,32], index: 2, kind: input, shape index: {}]
  %s3 = inlined_call_operand.vmem [shape: f32[1,32], index: 3, kind: input, shape index: {}]
  %s4 = inlined_call_operand.vmem [shape: bf16[32,16], index: 4, kind: input, shape index: {}]
  %s5 = inlined_call_operand.vmem [shape: f32[256,16], index: 5, kind: output, shape index: {}]
  %s6 = sld [smem:[#allocation0]]
  $region65: #{tpu_custom_call.1} parent=0
    _
  %s8 = ssub.s32 1, %s6
  %s9 = scalar_select 0, %s8, %s6
  loop: start=0, step=1, limit=6
  $region2: #{tpu_custom_call.1} parent=0 // loop_pre_header
    _
  $region3: #{tpu_custom_call.1} parent=0 // loop_header
    %s11 = sphi 0, %s15
    %p12 = scmp.ge.s32.totalorder %s11, 6
    %s18 = sphi 0, %s30
    %s19 = sphi 0, %s26
    %s20 = sphi 0, %s18
    %s21 = sphi 0, %s19
    %s22 = sphi 0, %s20
    %s23 = sphi 0, %s21
    %s33 = sphi 0, %s35
    %s36 = sphi 0, %s33
    %s37 = sphi 0, %s36
    %s53 = sphi 0, %s37
    %s57 = sphi 0, %s57
    %s59 = sphi 0, %s57
    %s60 = sphi 0, %s59
    %s74 = sphi 0, %s60
    %s78 = sphi 0, %s78
    %s80 = sphi 0, %s78
    %s81 = sphi 0, %s80
    %s95 = sphi 0, %s81
    %s99 = sphi 0, %s99
    %s101 = sphi 0, %s99
    %s102 = sphi 0, %s101
    %s116 = sphi 0, %s102
    %s120 = sphi 0, %s120
    %s122 = sphi 0, %s120
    %s123 = sphi 0, %s122
    %s137 = sphi 0, %s123
    %s143 = sphi 0, %s145
    %s146 = sphi 0, %s143
    %s147 = sphi 0, %s146
    %s163 = sphi 0, %s147
  $region4: #{tpu_custom_call.1} parent=0 // loop_header_branch
    %14 = sbr.rel (%p12) target = $region8
  $region5: #{tpu_custom_call.1} parent=0 // loop_body
    %s16 = ssub.s32 %s11, 1
    %s17 = ssub.s32 %s11, 2
    %s24 = sadd.s32 1, %s19
    %p25 = scmp.ge.s32.totalorder %s24, 2
    %s26 = scalar_select %p25, 0, %s24
    %s27 = sadd.s32 1, %s18
    %s28 = scalar_select %p25, %s27, %s18
    %p29 = scmp.ge.s32.totalorder %s28, 2
    %s30 = scalar_select %p29, 0, %s28
    %s31 = ssub.s32 %s19, %s26
    %p32 = scmp.eq.s32.totalorder %s31, 0
    %s34 = sadd.s32 %s33, 1
    %s35 = scalar_select %p32, %s33, %s34
    %p38 = pneg %p32
    %p39 = scmp.eq.s32.totalorder %s11, 3
    %p40 = por %p38, %p39
    %p41 = scmp.ne.s32.totalorder %s33, %s36
    %p42 = scmp.eq.s32.totalorder %s11, 0
    %p43 = por %p41, %p42
    %p44 = scmp.ne.s32.totalorder %s33, %s36
    %p45 = scmp.eq.s32.totalorder %s16, 3
    %p46 = por %p44, %p45
    %p47 = scmp.ne.s32.totalorder %s36, %s37
    %p48 = scmp.eq.s32.totalorder %s16, 0
    %p49 = por %p47, %p48
    %p50 = scmp.ne.s32.totalorder %s36, %s37
    %p51 = scmp.eq.s32.totalorder %s17, 3
    %p52 = por %p50, %p51
    %p54 = scmp.ne.s32.totalorder %s37, %s53
    %p55 = scmp.eq.s32.totalorder %s17, 0
    %p56 = por %p54, %p55
    %s58 = sadd.s32 %s57, 1
    %p61 = scmp.eq.s32.totalorder %s11, 3
    %p62 = scmp.ne.s32.totalorder %s57, %s59
    %p63 = scmp.eq.s32.totalorder %s11, 0
    %p64 = por %p62, %p63
    %p65 = scmp.ne.s32.totalorder %s57, %s59
    %p66 = scmp.eq.s32.totalorder %s16, 3
    %p67 = por %p65, %p66
    %p68 = scmp.ne.s32.totalorder %s59, %s60
    %p69 = scmp.eq.s32.totalorder %s16, 0
    %p70 = por %p68, %p69
    %p71 = scmp.ne.s32.totalorder %s59, %s60
    %p72 = scmp.eq.s32.totalorder %s17, 3
    %p73 = por %p71, %p72
    %p75 = scmp.ne.s32.totalorder %s60, %s74
    %p76 = scmp.eq.s32.totalorder %s17, 0
    %p77 = por %p75, %p76
    %s79 = sadd.s32 %s78, 1
    %p82 = scmp.eq.s32.totalorder %s11, 3
    %p83 = scmp.ne.s32.totalorder %s78, %s80
    %p84 = scmp.eq.s32.totalorder %s11, 0
    %p85 = por %p83, %p84
    %p86 = scmp.ne.s32.totalorder %s78, %s80
    %p87 = scmp.eq.s32.totalorder %s16, 3
    %p88 = por %p86, %p87
    %p89 = scmp.ne.s32.totalorder %s80, %s81
    %p90 = scmp.eq.s32.totalorder %s16, 0
    %p91 = por %p89, %p90
    %p92 = scmp.ne.s32.totalorder %s80, %s81
    %p93 = scmp.eq.s32.totalorder %s17, 3
    %p94 = por %p92, %p93
    %p96 = scmp.ne.s32.totalorder %s81, %s95
    %p97 = scmp.eq.s32.totalorder %s17, 0
    %p98 = por %p96, %p97
    %s100 = sadd.s32 %s99, 1
    %p103 = scmp.eq.s32.totalorder %s11, 3
    %p104 = scmp.ne.s32.totalorder %s99, %s101
    %p105 = scmp.eq.s32.totalorder %s11, 0
    %p106 = por %p104, %p105
    %p107 = scmp.ne.s32.totalorder %s99, %s101
    %p108 = scmp.eq.s32.totalorder %s16, 3
    %p109 = por %p107, %p108
    %p110 = scmp.ne.s32.totalorder %s101, %s102
    %p111 = scmp.eq.s32.totalorder %s16, 0
    %p112 = por %p110, %p111
    %p113 = scmp.ne.s32.totalorder %s101, %s102
    %p114 = scmp.eq.s32.totalorder %s17, 3
    %p115 = por %p113, %p114
    %p117 = scmp.ne.s32.totalorder %s102, %s116
    %p118 = scmp.eq.s32.totalorder %s17, 0
    %p119 = por %p117, %p118
    %s121 = sadd.s32 %s120, 1
    %p124 = scmp.eq.s32.totalorder %s11, 3
    %p125 = scmp.ne.s32.totalorder %s120, %s122
    %p126 = scmp.eq.s32.totalorder %s11, 0
    %p127 = por %p125, %p126
    %p128 = scmp.ne.s32.totalorder %s120, %s122
    %p129 = scmp.eq.s32.totalorder %s16, 3
    %p130 = por %p128, %p129
    %p131 = scmp.ne.s32.totalorder %s122, %s123
    %p132 = scmp.eq.s32.totalorder %s16, 0
    %p133 = por %p131, %p132
    %p134 = scmp.ne.s32.totalorder %s122, %s123
    %p135 = scmp.eq.s32.totalorder %s17, 3
    %p136 = por %p134, %p135
    %p138 = scmp.ne.s32.totalorder %s123, %s137
    %p139 = scmp.eq.s32.totalorder %s17, 0
    %p140 = por %p138, %p139
    %s141 = ssub.s32 %s19, %s26
    %p142 = scmp.eq.s32.totalorder %s141, 0
    %s144 = sadd.s32 %s143, 1
    %s145 = scalar_select %p142, %s143, %s144
    %p148 = pneg %p142
    %p149 = scmp.eq.s32.totalorder %s11, 3
    %p150 = por %p148, %p149
    %p151 = scmp.ne.s32.totalorder %s143, %s146
    %p152 = scmp.eq.s32.totalorder %s11, 0
    %p153 = por %p151, %p152
    %p154 = scmp.ne.s32.totalorder %s143, %s146
    %p155 = scmp.eq.s32.totalorder %s16, 3
    %p156 = por %p154, %p155
    %p157 = scmp.ne.s32.totalorder %s146, %s147
    %p158 = scmp.eq.s32.totalorder %s16, 0
    %p159 = por %p157, %p158
    %p160 = scmp.ne.s32.totalorder %s146, %s147
    %p161 = scmp.eq.s32.totalorder %s17, 3
    %p162 = por %p160, %p161
    %p164 = scmp.ne.s32.totalorder %s147, %s163
    %p165 = scmp.eq.s32.totalorder %s17, 0
    %p166 = por %p164, %p165
    %p167 = scmp.le.s32.totalorder 1, %s11
    %p168 = scmp.lt.s32.totalorder %s11, 5
    %p169 = pnand %p167, %p168
    %p170 = pneg %p169
    // Predicated region
    $region9: #{tpu_custom_call.1} parent=5 // pred_check
      _
    $region10: #{tpu_custom_call.1} parent=5 // pred_check_branch
      %172 = sbr.rel (%p169) target = $region12
    $region11: #{tpu_custom_call.1} parent=5 // pred_region
      %s173 = ssub.s32 %s11, 1
      // Predicated region
      $region13: #{tpu_custom_call.1} parent=11 // pred_check
        %p174 = pneg %p70
      $region14: #{tpu_custom_call.1} parent=11 // pred_check_branch
        %176 = sbr.rel (%p174) target = $region16
      $region15: #{tpu_custom_call.1} parent=11 // pred_region
        _
      $region16: #{tpu_custom_call.1} parent=11 // pred_fallthru
        _
      // Predicated region
      $region17: #{tpu_custom_call.1} parent=11 // pred_check
        %p177 = pneg %p91
      $region18: #{tpu_custom_call.1} parent=11 // pred_check_branch
        %179 = sbr.rel (%p177) target = $region20
      $region19: #{tpu_custom_call.1} parent=11 // pred_region
        _
      $region20: #{tpu_custom_call.1} parent=11 // pred_fallthru
        _
      // Predicated region
      $region21: #{tpu_custom_call.1} parent=11 // pred_check
        %p180 = pneg %p112
      $region22: #{tpu_custom_call.1} parent=11 // pred_check_branch
        %182 = sbr.rel (%p180) target = $region24
      $region23: #{tpu_custom_call.1} parent=11 // pred_region
        _
      $region24: #{tpu_custom_call.1} parent=11 // pred_fallthru
        _
      // Predicated region
      $region25: #{tpu_custom_call.1} parent=11 // pred_check
        %p183 = pneg %p133
      $region26: #{tpu_custom_call.1} parent=11 // pred_check_branch
        %185 = sbr.rel (%p183) target = $region28
      $region27: #{tpu_custom_call.1} parent=11 // pred_region
        _
      $region28: #{tpu_custom_call.1} parent=11 // pred_fallthru
        _
    $region12: #{tpu_custom_call.1} parent=5 // pred_fallthru
      _
    %p186 = scmp.lt.s32.totalorder %s11, 4
    // Predicated region
    $region29: #{tpu_custom_call.1} parent=5 // pred_check
      %p187 = pneg %p186
    $region30: #{tpu_custom_call.1} parent=5 // pred_check_branch
      %189 = sbr.rel (%p187) target = $region32
    $region31: #{tpu_custom_call.1} parent=5 // pred_region
      // Predicated region
      $region33: #{tpu_custom_call.1} parent=31 // pred_check
        %p190 = pneg %p43
      $region34: #{tpu_custom_call.1} parent=31 // pred_check_branch
        %192 = sbr.rel (%p190) target = $region36
      $region35: #{tpu_custom_call.1} parent=31 // pred_region
        %s193 = smul.u32 16, %s19
        %p194 = scmp.lt.s32.totalorder %s193, 31
        %s195 = scalar_select %p194, %s193, 31
        %s196 = smul.addr %s195, 4
        %s197 = scalar_lea.vmem %s0, %s196
        %s198 = smul.u32 16, %s19
      $region36: #{tpu_custom_call.1} parent=31 // pred_fallthru
        _
    $region32: #{tpu_custom_call.1} parent=5 // pred_fallthru
      _
    %p199 = scmp.le.s32.totalorder 1, %s11
    %p200 = scmp.lt.s32.totalorder %s11, 5
    %p201 = pnand %p199, %p200
    %p202 = pneg %p201
    // Predicated region
    $region37: #{tpu_custom_call.1} parent=5 // pred_check
      _
    $region38: #{tpu_custom_call.1} parent=5 // pred_check_branch
      %204 = sbr.rel (%p201) target = $region40
    $region39: #{tpu_custom_call.1} parent=5 // pred_region
      %s205 = ssub.s32 %s11, 1
      %s206 = smul.u32 16, %s21
      %p207 = scmp.lt.s32.totalorder %s206, 31
      %s208 = scalar_select %p207, %s206, 31
      %s209 = smul.addr %s208, 4
      %s210 = scalar_lea.vmem %s0, %s209
      %p211 = pneg %p49
      %p212 = pneg %p46
      %p213 = pneg %p70
      %p214 = pneg %p67
      %p215 = pneg %p91
      %p216 = pneg %p88
      %p217 = pneg %p112
      %p218 = pneg %p109
      %p219 = pneg %p133
      %p220 = pneg %p130
      %p221 = pneg %p159
      %p222 = pneg %p156
      %s223 = smul.u32 16, %s21
      %p224 = scmp.lt.s32.totalorder %s223, 31
      %s225 = scalar_select %p224, %s223, 31
      %s226 = smul.addr %s225, 8
      %s227 = scalar_lea.vmem %s5, %s226
      %s228 = smul.u32 16, %s21
      %p229 = scmp.lt.s32.totalorder %s228, 31
      %s230 = scalar_select %p229, %s228, 31
      %s231 = smul.addr %s230, 4
      %s232 = scalar_lea.vmem %s0, %s231
      %s233 = smul.u32 16, %s21
      %s234 = smul.u32 16, %s21
      %p235 = scmp.lt.s32.totalorder %s234, 31
      %s236 = scalar_select %p235, %s234, 31
      %s237 = smul.addr %s236, 8
      %s238 = scalar_lea.vmem %s5, %s237
      %s239 = smul.u32 16, %s21
      %v241 = vld [vmem:[%s232] sm:$0xf]
      %v242 = vld [vmem:[%s232 + $0x4] sm:$0xf]
      %v243 = vld [vmem:[%s232 + $0x8] sm:$0xf]
      %v244 = vld [vmem:[%s232 + $0xc] sm:$0xf]
      %v245 = vld [vmem:[%s232 + $0x10] sm:$0xf]
      %v246 = vld [vmem:[%s232 + $0x14] sm:$0xf]
      %v247 = vld [vmem:[%s232 + $0x18] sm:$0xf]
      %v248 = vld [vmem:[%s232 + $0x1c] sm:$0xf]
      %v249 = vld [vmem:[%s232 + $0x20] sm:$0xf]
      %v250 = vld [vmem:[%s232 + $0x24] sm:$0xf]
      %v251 = vld [vmem:[%s232 + $0x28] sm:$0xf]
      %v252 = vld [vmem:[%s232 + $0x2c] sm:$0xf]
      %v253 = vld [vmem:[%s232 + $0x30] sm:$0xf]
      %v254 = vld [vmem:[%s232 + $0x34] sm:$0xf]
      %v255 = vld [vmem:[%s232 + $0x38] sm:$0xf]
      %v256 = vld [vmem:[%s232 + $0x3c] sm:$0xf]
      %v257 = vld [vmem:[%s1] sm:$0xf]
      %v258 = vld [vmem:[%s1 + $0x4] sm:$0xf]
      %v259 = vld [vmem:[%s1 + $0x8] sm:$0xf]
      %v260 = vld [vmem:[%s1 + $0xc] sm:$0xf]
      %v277 = vunpack.c.l.b16 %v241
      %v278 = vunpack.c.l.b16 %v242
      %v279 = vunpack.c.l.b16 %v243
      %v280 = vunpack.c.l.b16 %v244
      %v281 = vunpack.c.l.b16 %v245
      %v282 = vunpack.c.l.b16 %v246
      %v283 = vunpack.c.l.b16 %v247
      %v284 = vunpack.c.l.b16 %v248
      %v285 = vunpack.c.l.b16 %v249
      %v286 = vunpack.c.l.b16 %v250
      %v287 = vunpack.c.l.b16 %v251
      %v288 = vunpack.c.l.b16 %v252
      %v289 = vunpack.c.l.b16 %v253
      %v290 = vunpack.c.l.b16 %v254
      %v291 = vunpack.c.l.b16 %v255
      %v292 = vunpack.c.l.b16 %v256
      %v293 = vpack.c.b16 %v278, %v277
      %v294 = vpack.c.b16 %v280, %v279
      %v295 = vpack.c.b16 %v282, %v281
      %v296 = vpack.c.b16 %v284, %v283
      %v297 = vpack.c.b16 %v286, %v285
      %v298 = vpack.c.b16 %v288, %v287
      %v299 = vpack.c.b16 %v290, %v289
      %v300 = vpack.c.b16 %v292, %v291
      %v305 = vunpack.c.l.b16 %v257
      %v306 = vunpack.c.l.b16 %v258
      %v307 = vunpack.c.l.b16 %v259
      %v308 = vunpack.c.l.b16 %v260
      %v309 = vpack.c.b16 %v306, %v305
      %v310 = vpack.c.b16 %v308, %v307
      %vm313 = vcmask 261120
      %v315 = vsel %vm313, %v293, 0
      %v318 = vsel %vm313, %v294, 0
      %v321 = vsel %vm313, %v295, 0
      %v324 = vsel %vm313, %v296, 0
      %v327 = vsel %vm313, %v297, 0
      %v330 = vsel %vm313, %v298, 0
      %v333 = vsel %vm313, %v299, 0
      %v336 = vsel %vm313, %v300, 0
      %338 = vmatprep.subr.bf16.mxu0 0
      %339 = vmatpush1.bf16.msra.mxu0 %v309
      %340 = vmatprep.subr.bf16.mxu0 0
      %341 = vmatpush1.bf16.msra.mxu0 %v310
      %342 = vmatprep.subr.bf16.mxu0 0
      %343 = vmatpush1.bf16.msra.mxu0 0
      %344 = vmatprep.subr.bf16.mxu0 0
      %345 = vmatpush1.bf16.msra.mxu0 0
      %346 = vmatprep.subr.bf16.mxu0 0
      %347 = vmatpush1.bf16.msra.mxu0 0
      %348 = vmatprep.subr.bf16.mxu0 0
      %349 = vmatpush1.bf16.msra.mxu0 0
      %350 = vmatprep.subr.bf16.mxu0 0
      %351 = vmatpush1.bf16.msra.mxu0 0
      %352 = vmatprep.subr.bf16.mxu0 0
      %353 = vmatpush1.bf16.msra.mxu0 0
      %354 = vmatprep.subr.bf16.mxu0 0
      %355 = vmatpush1.bf16.msra.mxu0 0
      %356 = vmatprep.subr.bf16.mxu0 0
      %357 = vmatpush1.bf16.msra.mxu0 0
      %358 = vmatprep.subr.bf16.mxu0 0
      %359 = vmatpush1.bf16.msra.mxu0 0
      %360 = vmatprep.subr.bf16.mxu0 0
      %361 = vmatpush1.bf16.msra.mxu0 0
      %362 = vmatprep.subr.bf16.mxu0 0
      %363 = vmatpush1.bf16.msra.mxu0 0
      %364 = vmatprep.subr.bf16.mxu0 0
      %365 = vmatpush1.bf16.msra.mxu0 0
      %366 = vmatprep.subr.bf16.mxu0 0
      %367 = vmatpush1.bf16.msra.mxu0 0
      %368 = vmatprep.subr.bf16.mxu0 0
      %369 = vmatpush1.bf16.msra.mxu0 0
      %370 = vmatprep.mubr.bf16.mxu0 0
      %371 = vmatmul.mubr.bf16.gmra.mrb[0].mxu0 %v315
      %v372 = vpop.f32.mrb[0].mxu0
      %v373 = vadd.f32 0.0, %v372
      %v374 = vpop.f32.mrb[0].mxu0
      %v375 = vpop.f32.mrb[0].mxu0
      %v376 = vadd.f32 0.0, %v375
      %v377 = vpop.f32.mrb[0].mxu0
      %378 = vmatprep.mubr.bf16.mxu0 0
      %379 = vmatmul.mubr.bf16.gmra.mrb[0].mxu0 %v318
      %v380 = vpop.f32.mrb[0].mxu0
      %v381 = vadd.f32 0.0, %v380
      %v382 = vpop.f32.mrb[0].mxu0
      %v383 = vpop.f32.mrb[0].mxu0
      %v384 = vadd.f32 0.0, %v383
      %v385 = vpop.f32.mrb[0].mxu0
      %386 = vmatprep.mubr.bf16.mxu0 0
      %387 = vmatmul.mubr.bf16.gmra.mrb[0].mxu0 %v321
      %v388 = vpop.f32.mrb[0].mxu0
      %v389 = vadd.f32 0.0, %v388
      %v390 = vpop.f32.mrb[0].mxu0
      %v391 = vpop.f32.mrb[0].mxu0
      %v392 = vadd.f32 0.0, %v391
      %v393 = vpop.f32.mrb[0].mxu0
      %394 = vmatprep.mubr.bf16.mxu0 0
      %395 = vmatmul.mubr.bf16.gmra.mrb[0].mxu0 %v324
      %v396 = vpop.f32.mrb[0].mxu0
      %v397 = vadd.f32 0.0, %v396
      %v398 = vpop.f32.mrb[0].mxu0
      %v399 = vpop.f32.mrb[0].mxu0
      %v400 = vadd.f32 0.0, %v399
      %v401 = vpop.f32.mrb[0].mxu0
      %402 = vmatprep.mubr.bf16.mxu0 0
      %403 = vmatmul.mubr.bf16.gmra.mrb[0].mxu0 %v327
      %v404 = vpop.f32.mrb[0].mxu0
      %v405 = vadd.f32 0.0, %v404
      %v406 = vpop.f32.mrb[0].mxu0
      %v407 = vpop.f32.mrb[0].mxu0
      %v408 = vadd.f32 0.0, %v407
      %v409 = vpop.f32.mrb[0].mxu0
      %410 = vmatprep.mubr.bf16.mxu0 0
      %411 = vmatmul.mubr.bf16.gmra.mrb[0].mxu0 %v330
      %v412 = vpop.f32.mrb[0].mxu0
      %v413 = vadd.f32 0.0, %v412
      %v414 = vpop.f32.mrb[0].mxu0
      %v415 = vpop.f32.mrb[0].mxu0
      %v416 = vadd.f32 0.0, %v415
      %v417 = vpop.f32.mrb[0].mxu0
      %418 = vmatprep.mubr.bf16.mxu0 0
      %419 = vmatmul.mubr.bf16.gmra.mrb[0].mxu0 %v333
      %v420 = vpop.f32.mrb[0].mxu0
      %v421 = vadd.f32 0.0, %v420
      %v422 = vpop.f32.mrb[0].mxu0
      %v423 = vpop.f32.mrb[0].mxu0
      %v424 = vadd.f32 0.0, %v423
      %v425 = vpop.f32.mrb[0].mxu0
      %426 = vmatprep.mubr.bf16.mxu0 0
      %427 = vmatmul.mubr.bf16.gmra.mrb[0].mxu0 %v336
      %v428 = vpop.f32.mrb[0].mxu0
      %v429 = vadd.f32 0.0, %v428
      %v430 = vpop.f32.mrb[0].mxu0
      %v431 = vpop.f32.mrb[0].mxu0
      %v432 = vadd.f32 0.0, %v431
      %v433 = vpop.f32.mrb[0].mxu0
      %434 = vdwg.mxu0
      %p435 = scmp.eq.s32.totalorder %s20, 0
      %p436 = scmp.eq.s32.totalorder %s21, 0
      %p437 = pnand %p435, %p436
      %p438 = pneg %p437
      // Predicated region
      $region41: #{tpu_custom_call.1} parent=39 // pred_check
        _
      $region42: #{tpu_custom_call.1} parent=39 // pred_check_branch
        %440 = sbr.rel (%p437) target = $region44
      $region43: #{tpu_custom_call.1} parent=39 // pred_region
        %vm441 = vcmask 253952
        %442 = vst.msk [vmem:[#allocation2] sm:$0x1] %vm441, 0.0
        %443 = vst.msk [vmem:[#allocation3] sm:$0x1] %vm441, 0.0
      $region44: #{tpu_custom_call.1} parent=39 // pred_fallthru
        _
      // Predicated region
      $region45: #{tpu_custom_call.1} parent=39 // pred_check
        %p444 = pneg %p435
      $region46: #{tpu_custom_call.1} parent=39 // pred_check_branch
        %446 = sbr.rel (%p444) target = $region48
      $region47: #{tpu_custom_call.1} parent=39 // pred_region
        %v447 = vld [vmem:[#allocation2] sm:$0x1]
        %v448 = vsel %vm313, %v373, 0.0
        %v449 = vsel %vm313, %v376, 0.0
        %v450 = vadd.f32 %v448, %v449
        %v451 = vsel %vm313, %v381, 0.0
        %v452 = vadd.f32 %v450, %v451
        %v453 = vsel %vm313, %v384, 0.0
        %v454 = vadd.f32 %v452, %v453
        %v455 = vsel %vm313, %v389, 0.0
        %v456 = vadd.f32 %v454, %v455
        %v457 = vsel %vm313, %v392, 0.0
        %v458 = vadd.f32 %v456, %v457
        %v459 = vsel %vm313, %v397, 0.0
        %v460 = vadd.f32 %v458, %v459
        %v461 = vsel %vm313, %v400, 0.0
        %v462 = vadd.f32 %v460, %v461
        %v463 = vsel %vm313, %v405, 0.0
        %v464 = vadd.f32 %v462, %v463
        %v465 = vsel %vm313, %v408, 0.0
        %v466 = vadd.f32 %v464, %v465
        %v467 = vsel %vm313, %v413, 0.0
        %v468 = vadd.f32 %v466, %v467
        %v469 = vsel %vm313, %v416, 0.0
        %v470 = vadd.f32 %v468, %v469
        %v471 = vsel %vm313, %v421, 0.0
        %v472 = vadd.f32 %v470, %v471
        %v473 = vsel %vm313, %v424, 0.0
        %v474 = vadd.f32 %v472, %v473
        %v475 = vsel %vm313, %v429, 0.0
        %v476 = vadd.f32 %v474, %v475
        %v477 = vsel %vm313, %v432, 0.0
        %v478 = vadd.f32 %v476, %v477
        %v479 = vrot.slane %v478, 4
        %v480 = vadd.f32 %v478, %v479
        %v481 = vrot.slane %v480, 2
        %v482 = vadd.f32 %v480, %v481
        %v483 = vrot.slane %v482, 1
        %v484 = vadd.f32 %v482, %v483
        %v485 = vadd.f32 %v447, %v484
        %vm486 = vcmask 253952
        %487 = vst.msk [vmem:[#allocation2] sm:$0x1] %vm486, %v485
        %v488 = vld [vmem:[#allocation3] sm:$0x1]
        %v489 = vmul.f32 %v373, %v373
        %v490 = vmul.f32 %v376, %v376
        %v491 = vmul.f32 %v381, %v381
        %v492 = vmul.f32 %v384, %v384
        %v493 = vmul.f32 %v389, %v389
        %v494 = vmul.f32 %v392, %v392
        %v495 = vmul.f32 %v397, %v397
        %v496 = vmul.f32 %v400, %v400
        %v497 = vmul.f32 %v405, %v405
        %v498 = vmul.f32 %v408, %v408
        %v499 = vmul.f32 %v413, %v413
        %v500 = vmul.f32 %v416, %v416
        %v501 = vmul.f32 %v421, %v421
        %v502 = vmul.f32 %v424, %v424
        %v503 = vmul.f32 %v429, %v429
        %v504 = vmul.f32 %v432, %v432
        %v505 = vsel %vm313, %v489, 0.0
        %v506 = vsel %vm313, %v490, 0.0
        %v507 = vadd.f32 %v505, %v506
        %v508 = vsel %vm313, %v491, 0.0
        %v509 = vadd.f32 %v507, %v508
        %v510 = vsel %vm313, %v492, 0.0
        %v511 = vadd.f32 %v509, %v510
        %v512 = vsel %vm313, %v493, 0.0
        %v513 = vadd.f32 %v511, %v512
        %v514 = vsel %vm313, %v494, 0.0
        %v515 = vadd.f32 %v513, %v514
        %v516 = vsel %vm313, %v495, 0.0
        %v517 = vadd.f32 %v515, %v516
        %v518 = vsel %vm313, %v496, 0.0
        %v519 = vadd.f32 %v517, %v518
        %v520 = vsel %vm313, %v497, 0.0
        %v521 = vadd.f32 %v519, %v520
        %v522 = vsel %vm313, %v498, 0.0
        %v523 = vadd.f32 %v521, %v522
        %v524 = vsel %vm313, %v499, 0.0
        %v525 = vadd.f32 %v523, %v524
        %v526 = vsel %vm313, %v500, 0.0
        %v527 = vadd.f32 %v525, %v526
        %v528 = vsel %vm313, %v501, 0.0
        %v529 = vadd.f32 %v527, %v528
        %v530 = vsel %vm313, %v502, 0.0
        %v531 = vadd.f32 %v529, %v530
        %v532 = vsel %vm313, %v503, 0.0
        %v533 = vadd.f32 %v531, %v532
        %v534 = vsel %vm313, %v504, 0.0
        %v535 = vadd.f32 %v533, %v534
        %v536 = vrot.slane %v535, 4
        %v537 = vadd.f32 %v535, %v536
        %v538 = vrot.slane %v537, 2
        %v539 = vadd.f32 %v537, %v538
        %v540 = vrot.slane %v539, 1
        %v541 = vadd.f32 %v539, %v540
        %v542 = vadd.f32 %v488, %v541
        %543 = vst.msk [vmem:[#allocation3] sm:$0x1] %vm486, %v542
      $region48: #{tpu_custom_call.1} parent=39 // pred_fallthru
        _
      %p544 = scmp.eq.s32.totalorder %s20, 1
      // Predicated region
      $region49: #{tpu_custom_call.1} parent=39 // pred_check
        %p545 = pneg %p544
      $region50: #{tpu_custom_call.1} parent=39 // pred_check_branch
        %547 = sbr.rel (%p545) target = $region52
      $region51: #{tpu_custom_call.1} parent=39 // pred_region
        %v548 = vld [vmem:[#allocation2] sm:$0x1]
        %v549 = vmul.f32 %v548, 0.005
        %v550 = vld [vmem:[#allocation3] sm:$0x1]
        %v551 = vmul.f32 %v550, 0.005
        %v552 = vmul.f32 %v549, %v549
        %v553 = vsub.f32 %v551, %v552
        %v554 = vld [vmem:[%s2] sm:$0x1]
        %v555 = vadd.f32 %v553, 1e-05
        %v556 = vrsqrt.pop %v555
        %v557 = vmul.f32 %v554, %v556
        %v558 = vld [vmem:[%s3] sm:$0x1]
        %v559 = vmul.f32 %v549, %v557
        %v560 = vsub.f32 %v558, %v559
        %v562 = vlaneseq
        %v563 = vshrl.u32 %v562, 7
        %v564 = vsub.s32 0, %v563
        %v565 = vrot.slane %v557, %v564
        %v567 = vmul.f32 %v373, %v565
        %v568 = vmul.f32 %v376, %v565
        %v569 = vmul.f32 %v381, %v565
        %v570 = vmul.f32 %v384, %v565
        %v571 = vmul.f32 %v389, %v565
        %v572 = vmul.f32 %v392, %v565
        %v573 = vmul.f32 %v397, %v565
        %v574 = vmul.f32 %v400, %v565
        %v575 = vmul.f32 %v405, %v565
        %v576 = vmul.f32 %v408, %v565
        %v577 = vmul.f32 %v413, %v565
        %v578 = vmul.f32 %v416, %v565
        %v579 = vmul.f32 %v421, %v565
        %v580 = vmul.f32 %v424, %v565
        %v581 = vmul.f32 %v429, %v565
        %v582 = vmul.f32 %v432, %v565
        %v584 = vlaneseq
        %v585 = vshrl.u32 %v584, 7
        %v586 = vsub.s32 0, %v585
        %v587 = vrot.slane %v560, %v586
        %v589 = vadd.f32 %v567, %v587
        %v590 = vadd.f32 %v568, %v587
        %v591 = vadd.f32 %v569, %v587
        %v592 = vadd.f32 %v570, %v587
        %v593 = vadd.f32 %v571, %v587
        %v594 = vadd.f32 %v572, %v587
        %v595 = vadd.f32 %v573, %v587
        %v596 = vadd.f32 %v574, %v587
        %v597 = vadd.f32 %v575, %v587
        %v598 = vadd.f32 %v576, %v587
        %v599 = vadd.f32 %v577, %v587
        %v600 = vadd.f32 %v578, %v587
        %v601 = vadd.f32 %v579, %v587
        %v602 = vadd.f32 %v580, %v587
        %v603 = vadd.f32 %v581, %v587
        %v604 = vadd.f32 %v582, %v587
        %v605 = vmax.f32 %v589, 0.0
        %v606 = vmax.f32 %v590, 0.0
        %v607 = vmax.f32 %v591, 0.0
        %v608 = vmax.f32 %v592, 0.0
        %v609 = vmax.f32 %v593, 0.0
        %v610 = vmax.f32 %v594, 0.0
        %v611 = vmax.f32 %v595, 0.0
        %v612 = vmax.f32 %v596, 0.0
        %v613 = vmax.f32 %v597, 0.0
        %v614 = vmax.f32 %v598, 0.0
        %v615 = vmax.f32 %v599, 0.0
        %v616 = vmax.f32 %v600, 0.0
        %v617 = vmax.f32 %v601, 0.0
        %v618 = vmax.f32 %v602, 0.0
        %v619 = vmax.f32 %v603, 0.0
        %v620 = vmax.f32 %v604, 0.0
        %v621 = vpack.c.bf16 %v606, %v605
        %v622 = vpack.c.bf16 %v608, %v607
        %v623 = vpack.c.bf16 %v610, %v609
        %v624 = vpack.c.bf16 %v612, %v611
        %v625 = vpack.c.bf16 %v614, %v613
        %v626 = vpack.c.bf16 %v616, %v615
        %v627 = vpack.c.bf16 %v618, %v617
        %v628 = vpack.c.bf16 %v620, %v619
        %v629 = vld [vmem:[%s4] sm:$0xf]
        %v630 = vld [vmem:[%s4 + $0x4] sm:$0xf]
        %v631 = vld [vmem:[%s4 + $0x8] sm:$0xf]
        %v632 = vld [vmem:[%s4 + $0xc] sm:$0xf]
        %v637 = vunpack.c.l.b16 %v629
        %v638 = vunpack.c.l.b16 %v630
        %v639 = vunpack.c.l.b16 %v631
        %v640 = vunpack.c.l.b16 %v632
        %v641 = vpack.c.b16 %v638, %v637
        %v642 = vpack.c.b16 %v640, %v639
        %v646 = vsel %vm313, %v621, 0
        %v649 = vsel %vm313, %v622, 0
        %v652 = vsel %vm313, %v623, 0
        %v655 = vsel %vm313, %v624, 0
        %v658 = vsel %vm313, %v625, 0
        %v661 = vsel %vm313, %v626, 0
        %v664 = vsel %vm313, %v627, 0
        %v667 = vsel %vm313, %v628, 0
        %669 = vmatprep.subr.bf16.mxu0 0
        %670 = vmatpush1.bf16.msra.mxu0 %v641
        %671 = vmatprep.subr.bf16.mxu0 0
        %672 = vmatpush1.bf16.msra.mxu0 %v642
        %673 = vmatprep.subr.bf16.mxu0 0
        %674 = vmatpush1.bf16.msra.mxu0 0
        %675 = vmatprep.subr.bf16.mxu0 0
        %676 = vmatpush1.bf16.msra.mxu0 0
        %677 = vmatprep.subr.bf16.mxu0 0
        %678 = vmatpush1.bf16.msra.mxu0 0
        %679 = vmatprep.subr.bf16.mxu0 0
        %680 = vmatpush1.bf16.msra.mxu0 0
        %681 = vmatprep.subr.bf16.mxu0 0
        %682 = vmatpush1.bf16.msra.mxu0 0
        %683 = vmatprep.subr.bf16.mxu0 0
        %684 = vmatpush1.bf16.msra.mxu0 0
        %685 = vmatprep.subr.bf16.mxu0 0
        %686 = vmatpush1.bf16.msra.mxu0 0
        %687 = vmatprep.subr.bf16.mxu0 0
        %688 = vmatpush1.bf16.msra.mxu0 0
        %689 = vmatprep.subr.bf16.mxu0 0
        %690 = vmatpush1.bf16.msra.mxu0 0
        %691 = vmatprep.subr.bf16.mxu0 0
        %692 = vmatpush1.bf16.msra.mxu0 0
        %693 = vmatprep.subr.bf16.mxu0 0
        %694 = vmatpush1.bf16.msra.mxu0 0
        %695 = vmatprep.subr.bf16.mxu0 0
        %696 = vmatpush1.bf16.msra.mxu0 0
        %697 = vmatprep.subr.bf16.mxu0 0
        %698 = vmatpush1.bf16.msra.mxu0 0
        %699 = vmatprep.subr.bf16.mxu0 0
        %700 = vmatpush1.bf16.msra.mxu0 0
        %701 = vmatprep.mubr.bf16.mxu0 0
        %702 = vmatmul.mubr.bf16.gmra.mrb[0].mxu0 %v646
        %v703 = vpop.f32.mrb[0].mxu0
        %v704 = vadd.f32 0.0, %v703
        %v705 = vpop.f32.mrb[0].mxu0
        %v706 = vpop.f32.mrb[0].mxu0
        %v707 = vadd.f32 0.0, %v706
        %v708 = vpop.f32.mrb[0].mxu0
        %709 = vmatprep.mubr.bf16.mxu0 0
        %710 = vmatmul.mubr.bf16.gmra.mrb[0].mxu0 %v649
        %v711 = vpop.f32.mrb[0].mxu0
        %v712 = vadd.f32 0.0, %v711
        %v713 = vpop.f32.mrb[0].mxu0
        %v714 = vpop.f32.mrb[0].mxu0
        %v715 = vadd.f32 0.0, %v714
        %v716 = vpop.f32.mrb[0].mxu0
        %717 = vmatprep.mubr.bf16.mxu0 0
        %718 = vmatmul.mubr.bf16.gmra.mrb[0].mxu0 %v652
        %v719 = vpop.f32.mrb[0].mxu0
        %v720 = vadd.f32 0.0, %v719
        %v721 = vpop.f32.mrb[0].mxu0
        %v722 = vpop.f32.mrb[0].mxu0
        %v723 = vadd.f32 0.0, %v722
        %v724 = vpop.f32.mrb[0].mxu0
        %725 = vmatprep.mubr.bf16.mxu0 0
        %726 = vmatmul.mubr.bf16.gmra.mrb[0].mxu0 %v655
        %v727 = vpop.f32.mrb[0].mxu0
        %v728 = vadd.f32 0.0, %v727
        %v729 = vpop.f32.mrb[0].mxu0
        %v730 = vpop.f32.mrb[0].mxu0
        %v731 = vadd.f32 0.0, %v730
        %v732 = vpop.f32.mrb[0].mxu0
        %733 = vmatprep.mubr.bf16.mxu0 0
        %734 = vmatmul.mubr.bf16.gmra.mrb[0].mxu0 %v658
        %v735 = vpop.f32.mrb[0].mxu0
        %v736 = vadd.f32 0.0, %v735
        %v737 = vpop.f32.mrb[0].mxu0
        %v738 = vpop.f32.mrb[0].mxu0
        %v739 = vadd.f32 0.0, %v738
        %v740 = vpop.f32.mrb[0].mxu0
        %741 = vmatprep.mubr.bf16.mxu0 0
        %742 = vmatmul.mubr.bf16.gmra.mrb[0].mxu0 %v661
        %v743 = vpop.f32.mrb[0].mxu0
        %v744 = vadd.f32 0.0, %v743
        %v745 = vpop.f32.mrb[0].mxu0
        %v746 = vpop.f32.mrb[0].mxu0
        %v747 = vadd.f32 0.0, %v746
        %v748 = vpop.f32.mrb[0].mxu0
        %749 = vmatprep.mubr.bf16.mxu0 0
        %750 = vmatmul.mubr.bf16.gmra.mrb[0].mxu0 %v664
        %v751 = vpop.f32.mrb[0].mxu0
        %v752 = vadd.f32 0.0, %v751
        %v753 = vpop.f32.mrb[0].mxu0
        %v754 = vpop.f32.mrb[0].mxu0
        %v755 = vadd.f32 0.0, %v754
        %v756 = vpop.f32.mrb[0].mxu0
        %757 = vmatprep.mubr.bf16.mxu0 0
        %758 = vmatmul.mubr.bf16.gmra.mrb[0].mxu0 %v667
        %v759 = vpop.f32.mrb[0].mxu0
        %v760 = vadd.f32 0.0, %v759
        %v761 = vpop.f32.mrb[0].mxu0
        %v762 = vpop.f32.mrb[0].mxu0
        %v763 = vadd.f32 0.0, %v762
        %v764 = vpop.f32.mrb[0].mxu0
        %765 = vdwg.mxu0
        %vm766 = vcmask 130048
        %767 = vst.msk [vmem:[%s238] sm:$0xff] %vm766, %v704
        %768 = vst.msk [vmem:[%s238 + $0x8] sm:$0xff] %vm766, %v707
        %769 = vst.msk [vmem:[%s238 + $0x10] sm:$0xff] %vm766, %v712
        %770 = vst.msk [vmem:[%s238 + $0x18] sm:$0xff] %vm766, %v715
        %771 = vst.msk [vmem:[%s238 + $0x20] sm:$0xff] %vm766, %v720
        %772 = vst.msk [vmem:[%s238 + $0x28] sm:$0xff] %vm766, %v723
        %773 = vst.msk [vmem:[%s238 + $0x30] sm:$0xff] %vm766, %v728
        %774 = vst.msk [vmem:[%s238 + $0x38] sm:$0xff] %vm766, %v731
        %775 = vst.msk [vmem:[%s238 + $0x40] sm:$0xff] %vm766, %v736
        %776 = vst.msk [vmem:[%s238 + $0x48] sm:$0xff] %vm766, %v739
        %777 = vst.msk [vmem:[%s238 + $0x50] sm:$0xff] %vm766, %v744
        %778 = vst.msk [vmem:[%s238 + $0x58] sm:$0xff] %vm766, %v747
        %779 = vst.msk [vmem:[%s238 + $0x60] sm:$0xff] %vm766, %v752
        %780 = vst.msk [vmem:[%s238 + $0x68] sm:$0xff] %vm766, %v755
        %781 = vst.msk [vmem:[%s238 + $0x70] sm:$0xff] %vm766, %v760
        %782 = vst.msk [vmem:[%s238 + $0x78] sm:$0xff] %vm766, %v763
      $region52: #{tpu_custom_call.1} parent=39 // pred_fallthru
        _
      %s783 = smul.u32 16, %s21
      %p784 = scmp.lt.s32.totalorder %s783, 31
      %s785 = scalar_select %p784, %s783, 31
      %s786 = smul.addr %s785, 8
      %s787 = scalar_lea.vmem %s5, %s786
      // Predicated region
      $region53: #{tpu_custom_call.1} parent=39 // pred_check
        %p788 = pneg %p156
      $region54: #{tpu_custom_call.1} parent=39 // pred_check_branch
        %790 = sbr.rel (%p788) target = $region56
      $region55: #{tpu_custom_call.1} parent=39 // pred_region
        %s791 = smul.u32 16, %s21
      $region56: #{tpu_custom_call.1} parent=39 // pred_fallthru
        _
    $region40: #{tpu_custom_call.1} parent=5 // pred_fallthru
      _
    %p792 = scmp.le.s32.totalorder 2, %s11
    // Predicated region
    $region57: #{tpu_custom_call.1} parent=5 // pred_check
      %p793 = pneg %p792
    $region58: #{tpu_custom_call.1} parent=5 // pred_check_branch
      %795 = sbr.rel (%p793) target = $region60
    $region59: #{tpu_custom_call.1} parent=5 // pred_region
      %s796 = ssub.s32 %s11, 2
      // Predicated region
      $region61: #{tpu_custom_call.1} parent=59 // pred_check
        %p797 = pneg %p162
      $region62: #{tpu_custom_call.1} parent=59 // pred_check_branch
        %799 = sbr.rel (%p797) target = $region64
      $region63: #{tpu_custom_call.1} parent=59 // pred_region
        %s800 = smul.u32 16, %s23
        %p801 = scmp.lt.s32.totalorder %s800, 31
        %s802 = scalar_select %p801, %s800, 31
        %s803 = smul.addr %s802, 8
        %s804 = scalar_lea.vmem %s5, %s803
      $region64: #{tpu_custom_call.1} parent=59 // pred_fallthru
        _
    $region60: #{tpu_custom_call.1} parent=5 // pred_fallthru
      _
  $region6: #{tpu_custom_call.1} parent=0 // loop_footer
    %s15 = sadd.s32 1, %s11
  $region7: #{tpu_custom_call.1} parent=0 // loop_footer_branch
    %10 = sbr.rel target = $region3
  $region8: #{tpu_custom_call.1} parent=0 // loop_exit
    _

</llo_original>
